<compile_context>
chip_gen: v6e
topology: v6e:2x2x1
jax: 0.10.0
libtpu: 0.0.40
codegen_flags: <defaults>
</compile_context>

<pallas_src>
import math
from functools import lru_cache

import jax
import jax.numpy as jnp
from jax.experimental import pallas as pl
from jax.experimental.pallas import tpu as pltpu


# ---------------------------------------------------------------------------
# Tiling / VMEM budget
# ---------------------------------------------------------------------------

_TARGET_BLOCK_BYTES = 4 * 1024 * 1024     # ~4 MiB per stream per block
_MAX_LANE_TILE = 8192                     # cap unrolled chunk loop at 64 chunks


def _vmem_cap_bytes():
    """75% of physical VMEM (48 MiB on v7x, 96 MiB on v5e/v6e), >=32 MiB."""
    try:
        cap = int(pltpu.get_tpu_info().vmem_capacity_bytes)
    except Exception:
        cap = 64 * 1024 * 1024
    return max(32 * 1024 * 1024, (cap * 3) // 4)


def _pick_tiles(Bp, Fp, itemsize):
    """Pick (batch_tile, feature_tile) for padded dims Bp (mult of 8), Fp (mult of 128)."""
    target_elems = max(8 * 128, _TARGET_BLOCK_BYTES // itemsize)

    # Feature tile: largest multiple-of-128 divisor of Fp that still leaves
    # room for >=8 batch rows in the element budget (and bounded unroll).
    tf_max = min(_MAX_LANE_TILE, max(128, target_elems // 8))
    tf = 128
    for d in range(min(Fp, tf_max) // 128, 0, -1):
        cand = d * 128
        if Fp % cand == 0:
            tf = cand
            break

    # Batch tile: largest multiple-of-8 divisor of Bp within the byte budget.
    # Keep >=2 batch tiles when possible so the "parallel" axis can be sharded
    # across v7x's two TensorCores (no effect on single-TC v5e/v6e).
    bt_budget = max(8, target_elems // tf)
    bt_cap = Bp // 2 if Bp >= 16 else Bp
    bt_cap = min(bt_cap, bt_budget)
    bt = 8
    for d in range(min(Bp, bt_cap) // 8, 0, -1):
        cand = d * 8
        if Bp % cand == 0:
            bt = cand
            break
    return bt, tf


# ---------------------------------------------------------------------------
# Kernel builder
# ---------------------------------------------------------------------------

def _make_kernel(bt, tf, nf, has_m, has_err, err_dtype):
    n_chunks = tf // 128

    def kernel(*refs):
        idx = 0
        mu_ref = refs[idx]; idx += 1
        x_ref = refs[idx]; idx += 1
        m_ref = None
        if has_m:
            m_ref = refs[idx]; idx += 1
        epd_ref = refs[idx]; idx += 1
        err_ref = None
        if has_err:
            err_ref = refs[idx]; idx += 1
        acc_ref = refs[idx]

        k = pl.program_id(1)

        @pl.when(k == 0)
        def _init():
            acc_ref[...] = jnp.zeros_like(acc_ref)

        # Per 128-lane chunk: load -> err -> (store err) -> accumulate e*e[*m].
        # No full-block f32 intermediates are materialized, so the working set
        # stays in vregs and the VMEM budget is just the DMA blocks + acc.
        for c in range(n_chunks):
            sl = slice(c * 128, (c + 1) * 128)
            mu_c = mu_ref[:, sl].astype(jnp.float32)
            x_c = x_ref[:, sl].astype(jnp.float32)
            e = x_c - mu_c
            if has_err:
                err_ref[:, sl] = e.astype(err_dtype)     # lane-dense 128-wide store
            chunk = e * e                                 # 0.5 hoisted to finalize
            if has_m:
                chunk = chunk * m_ref[:, sl].astype(jnp.float32)
            acc_ref[...] = acc_ref[...] + chunk

        # NOTE: the epd output block is resident across the whole feature axis
        # (its index_map returns (b, 0) for every k), so Pallas only writes it
        # back to HBM when the batch-block index changes / at grid end.
        # Writing it only at the last feature step is therefore safe.
        @pl.when(k == nf - 1)
        def _finalize():
            epd_ref[...] = 0.5 * jnp.sum(acc_ref[...], axis=1, keepdims=True)

    return kernel


@lru_cache(maxsize=None)
def _build_pc_call(B, F, dtype_name, has_m, has_err):
    in_dtype = jnp.dtype(dtype_name)
    itemsize = in_dtype.itemsize

    # Pad to TPU-friendly dims; padded mu/x are zero => err == 0 there, so the
    # energy and per-datapoint energy are unaffected.
    Bp = ((B + 7) // 8) * 8
    Fp = ((F + 127) // 128) * 128

    bt, tf = _pick_tiles(Bp, Fp, itemsize)
    nb, nf = Bp // bt, Fp // tf

    kernel = _make_kernel(bt, tf, nf, has_m, has_err, in_dtype)

    in_specs = [
        pl.BlockSpec((bt, tf), lambda b, k: (b, k)),      # mu
        pl.BlockSpec((bt, tf), lambda b, k: (b, k)),      # x
    ]
    if has_m:
        # Mask tile is tiny ((1, tf)); the refetch across batch tiles is noise
        # next to the (bt, tf) mu/x/err streams.
        in_specs.append(pl.BlockSpec((1, tf), lambda b, k: (0, k)))

    out_shapes = [jax.ShapeDtypeStruct((Bp, 1), jnp.float32)]
    out_specs = [pl.BlockSpec((bt, 1), lambda b, k: (b, 0))]
    if has_err:
        out_shapes.append(jax.ShapeDtypeStruct((Bp, Fp), in_dtype))
        out_specs.append(pl.BlockSpec((bt, tf), lambda b, k: (b, k)))

    scratch_shapes = [pltpu.VMEM((bt, 128), jnp.float32)]

    # VMEM budget: double-buffered mu/x(/err) blocks + mask + accumulator + epd.
    block_bytes = bt * tf * itemsize
    n_streams = 2 + (1 if has_err else 0)
    need = (n_streams * 2 * block_bytes
            + (2 * tf * itemsize if has_m else 0)
            + bt * 128 * 4
            + 2 * bt * 4)
    vmem_limit = int(min(_vmem_cap_bytes(), max(32 * 1024 * 1024, need + (8 << 20))))

    bytes_accessed = (n_streams * Bp * Fp * itemsize
                      + (Fp * itemsize if has_m else 0)
                      + Bp * 4)
    cost = pl.CostEstimate(flops=4 * Bp * Fp, transcendentals=0,
                           bytes_accessed=int(bytes_accessed))

    call = pl.pallas_call(
        kernel,
        out_shape=tuple(out_shapes),
        grid_spec=pltpu.PrefetchScalarGridSpec(
            num_scalar_prefetch=0,
            grid=(nb, nf),
            in_specs=in_specs,
            out_specs=tuple(out_specs),
            scratch_shapes=scratch_shapes,
        ),
        compiler_params=pltpu.CompilerParams(
            dimension_semantics=("parallel", "arbitrary"),
            vmem_limit_bytes=vmem_limit,
        ),
        cost_estimate=cost,
    )

    pad_b, pad_f = Bp - B, Fp - F

    def fn(*args):
        mu2d, x2d = args[0], args[1]
        if pad_b or pad_f:
            mu_p = jnp.pad(mu2d, ((0, pad_b), (0, pad_f)))
            x_p = jnp.pad(x2d, ((0, pad_b), (0, pad_f)))
        else:
            mu_p, x_p = mu2d, x2d
        call_args = [mu_p, x_p]
        if has_m:
            m2d = args[2]
            call_args.append(jnp.pad(m2d, ((0, 0), (0, pad_f))) if pad_f else m2d)
        outs = call(*call_args)
        epd = outs[0][:B]                              # [B, 1] f32
        err = outs[1][:B, :F] if has_err else None     # input dtype
        return jnp.sum(epd), epd, err

    return jax.jit(fn)


# ---------------------------------------------------------------------------
# Layer wrapper
# ---------------------------------------------------------------------------

class PCLayer:
    """JAX/Pallas port of predictive_coding.PCLayer (default energy / sample fns).

    TODO(synk): arbitrary user-supplied `energy_fn` / `sample_x_fn` callables and
    the pairwise S interaction mask are not lowered to Pallas; the default
    (0.5*(mu-x)^2 energy, x sampled as mu) and the elementwise M mask are.
    """

    def __init__(self, M=None, is_holding_error=False,
                 is_keep_energy_per_datapoint=False):
        self._M = M
        self.is_holding_error = bool(is_holding_error)
        self.is_keep_energy_per_datapoint = bool(is_keep_energy_per_datapoint)
        self._energy = None
        self._energy_per_datapoint = None
        self._is_sample_x = False
        self._x = None
        self.error = None
        self.training = False  # matches torch: module starts in eval()

    # --- torch-like API -----------------------------------------------------
    def train(self): self.training = True
    def eval(self): self.training = False
    def set_is_sample_x(self, b): self._is_sample_x = bool(b)
    def get_is_sample_x(self): return self._is_sample_x
    def get_x(self): return self._x
    def energy(self): return self._energy
    def clear_energy(self): self._energy = None
    def energy_per_datapoint(self):
        assert self.is_keep_energy_per_datapoint
        return self._energy_per_datapoint

    # --- forward ------------------------------------------------------------
    def forward(self, mu):
        if not self.training:
            return mu

        # Auto-resample if x missing or shape changed (mirrors the warnings path).
        if not self._is_sample_x:
            if self._x is None or tuple(self._x.shape) != tuple(mu.shape):
                self._is_sample_x = True
        if self._is_sample_x:
            self._x = mu  # default sample_x_fn: detached copy of mu
            self._is_sample_x = False

        x = self._x
        B = mu.shape[0]
        F = int(math.prod(mu.shape[1:])) if mu.ndim > 1 else 1

        # Keep native dtype (no forced f32 cast); promote only if mu/x differ.
        dt = jnp.promote_types(mu.dtype, jnp.asarray(x).dtype)
        mu2d = jnp.asarray(mu).reshape(B, F).astype(dt)
        x2d = jnp.asarray(x).reshape(B, F).astype(dt)

        has_m = self._M is not None
        want_err = self.is_holding_error
        fn = _build_pc_call(B, F, jnp.dtype(dt).name, has_m, want_err)

        args = [mu2d, x2d]
        if has_m:
            # Mask travels in the input dtype (bf16 stays bf16); cast in-kernel.
            args.append(jnp.asarray(self._M).astype(dt).reshape(1, F))

        energy, epd, err = fn(*args)

        self._energy = energy                      # f32 scalar (accumulated in f32)
        if self.is_keep_energy_per_datapoint:
            self._energy_per_datapoint = epd       # [B, 1] f32
        if want_err:
            self.error = err.reshape(mu.shape)     # input dtype preserved
        return self._x

    __call__ = forward


# ---------------------------------------------------------------------------
# Self-test
# ---------------------------------------------------------------------------

if __name__ == "__main__":
    key = jax.random.PRNGKey(0)
    k1, k2, k3, k4 = jax.random.split(key, 4)

    # NCHW-style input, flattened to [B, C*H*W] inside the layer.
    mu = jax.random.normal(k1, (2, 4, 16, 16), jnp.float32)

    layer = PCLayer(is_holding_error=True, is_keep_energy_per_datapoint=True)
    layer.train()
    layer.set_is_sample_x(True)

    # First call samples x := mu  -> energy should be exactly 0.
    out0 = layer(mu)
    jax.block_until_ready(out0)
    assert float(layer.energy()) == 0.0

    # Simulate an inference step that moved x away from mu, then recompute.
    layer._x = layer._x + 0.1 * jax.random.normal(k2, mu.shape, jnp.float32)
    out = layer(mu)
    jax.block_until_ready(layer.energy())

    # Pure-JAX reference check.
    ref_energy = jnp.sum(0.5 * (mu - layer._x) ** 2)
    ref_epd = jnp.sum(0.5 * (mu - layer._x) ** 2, axis=(1, 2, 3)).reshape(-1, 1)
    ref_err = layer._x - mu
    assert jnp.allclose(layer.energy(), ref_energy, rtol=1e-5, atol=1e-5)
    assert jnp.allclose(layer.energy_per_datapoint(), ref_epd, rtol=1e-5, atol=1e-5)
    assert jnp.allclose(layer.error, ref_err, rtol=1e-5, atol=1e-5)
    assert layer.error.dtype == mu.dtype
    assert layer.energy_per_datapoint().shape == (mu.shape[0], 1)
    assert jnp.allclose(out, layer._x)

    # Variant: elementwise M mask, no error writeback (specialized kernel).
    M = (jax.random.uniform(k3, (4, 16, 16)) > 0.5).astype(jnp.float32)
    layer_m = PCLayer(M=M)
    layer_m.train()
    layer_m.set_is_sample_x(True)
    _ = layer_m(mu)
    layer_m._x = layer_m._x + 0.05
    _ = layer_m(mu)
    jax.block_until_ready(layer_m.energy())
    ref_em = jnp.sum(0.5 * (mu - layer_m._x) ** 2 * M[None])
    assert jnp.allclose(layer_m.energy(), ref_em, rtol=1e-5, atol=1e-5)

    # Variant: bf16 inputs stay bf16 for DMA + held error; energy accumulated in f32.
    mu_bf = mu.astype(jnp.bfloat16)
    layer_bf = PCLayer(is_holding_error=True)
    layer_bf.train()
    layer_bf.set_is_sample_x(True)
    _ = layer_bf(mu_bf)
    layer_bf._x = (layer_bf._x.astype(jnp.float32)
                   + 0.1 * jax.random.normal(k2, mu.shape, jnp.float32)
                   ).astype(jnp.bfloat16)
    _ = layer_bf(mu_bf)
    jax.block_until_ready(layer_bf.energy())
    assert layer_bf.error.dtype == jnp.bfloat16
    ref_ebf = jnp.sum(
        0.5 * (mu_bf.astype(jnp.float32) - layer_bf._x.astype(jnp.float32)) ** 2)
    assert jnp.allclose(layer_bf.energy(), ref_ebf, rtol=1e-3, atol=1e-3)

    # Variant: awkward (non-8 / non-128 divisible) shape exercises padding path.
    mu_odd = jax.random.normal(k4, (2, 3, 5, 7), jnp.float32)   # F = 105
    layer_odd = PCLayer(is_holding_error=True, is_keep_energy_per_datapoint=True)
    layer_odd.train()
    layer_odd.set_is_sample_x(True)
    _ = layer_odd(mu_odd)
    layer_odd._x = layer_odd._x + 0.2 * jax.random.normal(k2, mu_odd.shape, jnp.float32)
    _ = layer_odd(mu_odd)
    jax.block_until_ready(layer_odd.energy())
    ref_eo = jnp.sum(0.5 * (mu_odd - layer_odd._x) ** 2)
    ref_epdo = jnp.sum(0.5 * (mu_odd - layer_odd._x) ** 2, axis=(1, 2, 3)).reshape(-1, 1)
    assert jnp.allclose(layer_odd.energy(), ref_eo, rtol=1e-5, atol=1e-6)
    assert jnp.allclose(layer_odd.energy_per_datapoint(), ref_epdo, rtol=1e-5, atol=1e-6)
    assert jnp.allclose(layer_odd.error, layer_odd._x - mu_odd, rtol=1e-5, atol=1e-6)
    assert layer_odd.error.shape == mu_odd.shape

    # Eval mode: forward returns the input unchanged.
    layer.eval()
    assert jnp.allclose(layer(mu), mu)

    print("KERNEL_OK")
</pallas_src>

<mosaic_0001>
module attributes {stable_mosaic.version = 11 : i64} {
  func.func @kernel(%arg0: i32, %arg1: i32, %arg2: memref<8x1024xf32, #tpu.memory_space<vmem>>, %arg3: memref<8x1024xf32, #tpu.memory_space<vmem>>, %arg4: memref<8x1xf32, #tpu.memory_space<vmem>>, %arg5: memref<8x1024xf32, #tpu.memory_space<vmem>>, %arg6: memref<8x128xf32, #tpu.memory_space<vmem>>) attributes {dimension_semantics = [#tpu.dimension_semantics<parallel>, #tpu.dimension_semantics<arbitrary>], iteration_bounds = array<i64: 1, 1>, scalar_prefetch = 0 : i64, scratch_operands = 1 : i64, tpu.core_type = #tpu.core_type<tc>, window_params = [{transform_indices = @transform_0, window_bounds = array<i64: 8, 1024>}, {transform_indices = @transform_1, window_bounds = array<i64: 8, 1024>}, {transform_indices = @transform_2, window_bounds = array<i64: 8, 1>}, {transform_indices = @transform_3, window_bounds = array<i64: 8, 1024>}]} {
    %c0_i32 = arith.constant 0 : i32
    %0 = arith.cmpi eq, %arg1, %c0_i32 : i32
    %1 = arith.extui %0 : i1 to i32
    %c0_i32_0 = arith.constant 0 : i32
    %2 = arith.cmpi ne, %1, %c0_i32_0 : i32
    scf.if %2 {
      %cst = arith.constant 0.000000e+00 : f32
      %70 = vector.broadcast %cst : f32 to vector<8x128xf32>
      %c0_75 = arith.constant 0 : index
      %c0_76 = arith.constant 0 : index
      %71 = vector.load %arg6[%c0_75, %c0_76] : memref<8x128xf32, #tpu.memory_space<vmem>>, vector<8x128xf32>
      tpu.vector_store %arg6[%c0_75, %c0_76], %70 {strides = array<i32>} : memref<8x128xf32, #tpu.memory_space<vmem>>, vector<8x128xf32>,
    } else {
    }
    %c0 = arith.constant 0 : index
    %c0_1 = arith.constant 0 : index
    %3 = vector.load %arg2[%c0, %c0_1] : memref<8x1024xf32, #tpu.memory_space<vmem>>, vector<8x128xf32>
    %c0_2 = arith.constant 0 : index
    %c0_3 = arith.constant 0 : index
    %4 = vector.load %arg3[%c0_2, %c0_3] : memref<8x1024xf32, #tpu.memory_space<vmem>>, vector<8x128xf32>
    %5 = arith.subf %4, %3 : vector<8x128xf32>
    %c0_4 = arith.constant 0 : index
    %c0_5 = arith.constant 0 : index
    %6 = vector.load %arg5[%c0_4, %c0_5] : memref<8x1024xf32, #tpu.memory_space<vmem>>, vector<8x128xf32>
    tpu.vector_store %arg5[%c0_4, %c0_5], %5 {strides = array<i32>} : memref<8x1024xf32, #tpu.memory_space<vmem>>, vector<8x128xf32>,
    %7 = arith.mulf %5, %5 : vector<8x128xf32>
    %c0_6 = arith.constant 0 : index
    %c0_7 = arith.constant 0 : index
    %8 = vector.load %arg6[%c0_6, %c0_7] : memref<8x128xf32, #tpu.memory_space<vmem>>, vector<8x128xf32>
    %9 = arith.addf %8, %7 : vector<8x128xf32>
    %c0_8 = arith.constant 0 : index
    %c0_9 = arith.constant 0 : index
    %10 = vector.load %arg6[%c0_8, %c0_9] : memref<8x128xf32, #tpu.memory_space<vmem>>, vector<8x128xf32>
    tpu.vector_store %arg6[%c0_8, %c0_9], %9 {strides = array<i32>} : memref<8x128xf32, #tpu.memory_space<vmem>>, vector<8x128xf32>,
    %c0_10 = arith.constant 0 : index
    %c128 = arith.constant 128 : index
    %11 = vector.load %arg2[%c0_10, %c128] : memref<8x1024xf32, #tpu.memory_space<vmem>>, vector<8x128xf32>
    %c0_11 = arith.constant 0 : index
    %c128_12 = arith.constant 128 : index
    %12 = vector.load %arg3[%c0_11, %c128_12] : memref<8x1024xf32, #tpu.memory_space<vmem>>, vector<8x128xf32>
    %13 = arith.subf %12, %11 : vector<8x128xf32>
    %c0_13 = arith.constant 0 : index
    %c128_14 = arith.constant 128 : index
    %14 = vector.load %arg5[%c0_13, %c128_14] : memref<8x1024xf32, #tpu.memory_space<vmem>>, vector<8x128xf32>
    tpu.vector_store %arg5[%c0_13, %c128_14], %13 {strides = array<i32>} : memref<8x1024xf32, #tpu.memory_space<vmem>>, vector<8x128xf32>,
    %15 = arith.mulf %13, %13 : vector<8x128xf32>
    %c0_15 = arith.constant 0 : index
    %c0_16 = arith.constant 0 : index
    %16 = vector.load %arg6[%c0_15, %c0_16] : memref<8x128xf32, #tpu.memory_space<vmem>>, vector<8x128xf32>
    %17 = arith.addf %16, %15 : vector<8x128xf32>
    %c0_17 = arith.constant 0 : index
    %c0_18 = arith.constant 0 : index
    %18 = vector.load %arg6[%c0_17, %c0_18] : memref<8x128xf32, #tpu.memory_space<vmem>>, vector<8x128xf32>
    tpu.vector_store %arg6[%c0_17, %c0_18], %17 {strides = array<i32>} : memref<8x128xf32, #tpu.memory_space<vmem>>, vector<8x128xf32>,
    %c0_19 = arith.constant 0 : index
    %c256 = arith.constant 256 : index
    %19 = vector.load %arg2[%c0_19, %c256] : memref<8x1024xf32, #tpu.memory_space<vmem>>, vector<8x128xf32>
    %c0_20 = arith.constant 0 : index
    %c256_21 = arith.constant 256 : index
    %20 = vector.load %arg3[%c0_20, %c256_21] : memref<8x1024xf32, #tpu.memory_space<vmem>>, vector<8x128xf32>
    %21 = arith.subf %20, %19 : vector<8x128xf32>
    %c0_22 = arith.constant 0 : index
    %c256_23 = arith.constant 256 : index
    %22 = vector.load %arg5[%c0_22, %c256_23] : memref<8x1024xf32, #tpu.memory_space<vmem>>, vector<8x128xf32>
    tpu.vector_store %arg5[%c0_22, %c256_23], %21 {strides = array<i32>} : memref<8x1024xf32, #tpu.memory_space<vmem>>, vector<8x128xf32>,
    %23 = arith.mulf %21, %21 : vector<8x128xf32>
    %c0_24 = arith.constant 0 : index
    %c0_25 = arith.constant 0 : index
    %24 = vector.load %arg6[%c0_24, %c0_25] : memref<8x128xf32, #tpu.memory_space<vmem>>, vector<8x128xf32>
    %25 = arith.addf %24, %23 : vector<8x128xf32>
    %c0_26 = arith.constant 0 : index
    %c0_27 = arith.constant 0 : index
    %26 = vector.load %arg6[%c0_26, %c0_27] : memref<8x128xf32, #tpu.memory_space<vmem>>, vector<8x128xf32>
    tpu.vector_store %arg6[%c0_26, %c0_27], %25 {strides = array<i32>} : memref<8x128xf32, #tpu.memory_space<vmem>>, vector<8x128xf32>,
    %c0_28 = arith.constant 0 : index
    %c384 = arith.constant 384 : index
    %27 = vector.load %arg2[%c0_28, %c384] : memref<8x1024xf32, #tpu.memory_space<vmem>>, vector<8x128xf32>
    %c0_29 = arith.constant 0 : index
    %c384_30 = arith.constant 384 : index
    %28 = vector.load %arg3[%c0_29, %c384_30] : memref<8x1024xf32, #tpu.memory_space<vmem>>, vector<8x128xf32>
    %29 = arith.subf %28, %27 : vector<8x128xf32>
    %c0_31 = arith.constant 0 : index
    %c384_32 = arith.constant 384 : index
    %30 = vector.load %arg5[%c0_31, %c384_32] : memref<8x1024xf32, #tpu.memory_space<vmem>>, vector<8x128xf32>
    tpu.vector_store %arg5[%c0_31, %c384_32], %29 {strides = array<i32>} : memref<8x1024xf32, #tpu.memory_space<vmem>>, vector<8x128xf32>,
    %31 = arith.mulf %29, %29 : vector<8x128xf32>
    %c0_33 = arith.constant 0 : index
    %c0_34 = arith.constant 0 : index
    %32 = vector.load %arg6[%c0_33, %c0_34] : memref<8x128xf32, #tpu.memory_space<vmem>>, vector<8x128xf32>
    %33 = arith.addf %32, %31 : vector<8x128xf32>
    %c0_35 = arith.constant 0 : index
    %c0_36 = arith.constant 0 : index
    %34 = vector.load %arg6[%c0_35, %c0_36] : memref<8x128xf32, #tpu.memory_space<vmem>>, vector<8x128xf32>
    tpu.vector_store %arg6[%c0_35, %c0_36], %33 {strides = array<i32>} : memref<8x128xf32, #tpu.memory_space<vmem>>, vector<8x128xf32>,
    %c0_37 = arith.constant 0 : index
    %c512 = arith.constant 512 : index
    %35 = vector.load %arg2[%c0_37, %c512] : memref<8x1024xf32, #tpu.memory_space<vmem>>, vector<8x128xf32>
    %c0_38 = arith.constant 0 : index
    %c512_39 = arith.constant 512 : index
    %36 = vector.load %arg3[%c0_38, %c512_39] : memref<8x1024xf32, #tpu.memory_space<vmem>>, vector<8x128xf32>
    %37 = arith.subf %36, %35 : vector<8x128xf32>
    %c0_40 = arith.constant 0 : index
    %c512_41 = arith.constant 512 : index
    %38 = vector.load %arg5[%c0_40, %c512_41] : memref<8x1024xf32, #tpu.memory_space<vmem>>, vector<8x128xf32>
    tpu.vector_store %arg5[%c0_40, %c512_41], %37 {strides = array<i32>} : memref<8x1024xf32, #tpu.memory_space<vmem>>, vector<8x128xf32>,
    %39 = arith.mulf %37, %37 : vector<8x128xf32>
    %c0_42 = arith.constant 0 : index
    %c0_43 = arith.constant 0 : index
    %40 = vector.load %arg6[%c0_42, %c0_43] : memref<8x128xf32, #tpu.memory_space<vmem>>, vector<8x128xf32>
    %41 = arith.addf %40, %39 : vector<8x128xf32>
    %c0_44 = arith.constant 0 : index
    %c0_45 = arith.constant 0 : index
    %42 = vector.load %arg6[%c0_44, %c0_45] : memref<8x128xf32, #tpu.memory_space<vmem>>, vector<8x128xf32>
    tpu.vector_store %arg6[%c0_44, %c0_45], %41 {strides = array<i32>} : memref<8x128xf32, #tpu.memory_space<vmem>>, vector<8x128xf32>,
    %c0_46 = arith.constant 0 : index
    %c640 = arith.constant 640 : index
    %43 = vector.load %arg2[%c0_46, %c640] : memref<8x1024xf32, #tpu.memory_space<vmem>>, vector<8x128xf32>
    %c0_47 = arith.constant 0 : index
    %c640_48 = arith.constant 640 : index
    %44 = vector.load %arg3[%c0_47, %c640_48] : memref<8x1024xf32, #tpu.memory_space<vmem>>, vector<8x128xf32>
    %45 = arith.subf %44, %43 : vector<8x128xf32>
    %c0_49 = arith.constant 0 : index
    %c640_50 = arith.constant 640 : index
    %46 = vector.load %arg5[%c0_49, %c640_50] : memref<8x1024xf32, #tpu.memory_space<vmem>>, vector<8x128xf32>
    tpu.vector_store %arg5[%c0_49, %c640_50], %45 {strides = array<i32>} : memref<8x1024xf32, #tpu.memory_space<vmem>>, vector<8x128xf32>,
    %47 = arith.mulf %45, %45 : vector<8x128xf32>
    %c0_51 = arith.constant 0 : index
    %c0_52 = arith.constant 0 : index
    %48 = vector.load %arg6[%c0_51, %c0_52] : memref<8x128xf32, #tpu.memory_space<vmem>>, vector<8x128xf32>
    %49 = arith.addf %48, %47 : vector<8x128xf32>
    %c0_53 = arith.constant 0 : index
    %c0_54 = arith.constant 0 : index
    %50 = vector.load %arg6[%c0_53, %c0_54] : memref<8x128xf32, #tpu.memory_space<vmem>>, vector<8x128xf32>
    tpu.vector_store %arg6[%c0_53, %c0_54], %49 {strides = array<i32>} : memref<8x128xf32, #tpu.memory_space<vmem>>, vector<8x128xf32>,
    %c0_55 = arith.constant 0 : index
    %c768 = arith.constant 768 : index
    %51 = vector.load %arg2[%c0_55, %c768] : memref<8x1024xf32, #tpu.memory_space<vmem>>, vector<8x128xf32>
    %c0_56 = arith.constant 0 : index
    %c768_57 = arith.constant 768 : index
    %52 = vector.load %arg3[%c0_56, %c768_57] : memref<8x1024xf32, #tpu.memory_space<vmem>>, vector<8x128xf32>
    %53 = arith.subf %52, %51 : vector<8x128xf32>
    %c0_58 = arith.constant 0 : index
    %c768_59 = arith.constant 768 : index
    %54 = vector.load %arg5[%c0_58, %c768_59] : memref<8x1024xf32, #tpu.memory_space<vmem>>, vector<8x128xf32>
    tpu.vector_store %arg5[%c0_58, %c768_59], %53 {strides = array<i32>} : memref<8x1024xf32, #tpu.memory_space<vmem>>, vector<8x128xf32>,
    %55 = arith.mulf %53, %53 : vector<8x128xf32>
    %c0_60 = arith.constant 0 : index
    %c0_61 = arith.constant 0 : index
    %56 = vector.load %arg6[%c0_60, %c0_61] : memref<8x128xf32, #tpu.memory_space<vmem>>, vector<8x128xf32>
    %57 = arith.addf %56, %55 : vector<8x128xf32>
    %c0_62 = arith.constant 0 : index
    %c0_63 = arith.constant 0 : index
    %58 = vector.load %arg6[%c0_62, %c0_63] : memref<8x128xf32, #tpu.memory_space<vmem>>, vector<8x128xf32>
    tpu.vector_store %arg6[%c0_62, %c0_63], %57 {strides = array<i32>} : memref<8x128xf32, #tpu.memory_space<vmem>>, vector<8x128xf32>,
    %c0_64 = arith.constant 0 : index
    %c896 = arith.constant 896 : index
    %59 = vector.load %arg2[%c0_64, %c896] : memref<8x1024xf32, #tpu.memory_space<vmem>>, vector<8x128xf32>
    %c0_65 = arith.constant 0 : index
    %c896_66 = arith.constant 896 : index
    %60 = vector.load %arg3[%c0_65, %c896_66] : memref<8x1024xf32, #tpu.memory_space<vmem>>, vector<8x128xf32>
    %61 = arith.subf %60, %59 : vector<8x128xf32>
    %c0_67 = arith.constant 0 : index
    %c896_68 = arith.constant 896 : index
    %62 = vector.load %arg5[%c0_67, %c896_68] : memref<8x1024xf32, #tpu.memory_space<vmem>>, vector<8x128xf32>
    tpu.vector_store %arg5[%c0_67, %c896_68], %61 {strides = array<i32>} : memref<8x1024xf32, #tpu.memory_space<vmem>>, vector<8x128xf32>,
    %63 = arith.mulf %61, %61 : vector<8x128xf32>
    %c0_69 = arith.constant 0 : index
    %c0_70 = arith.constant 0 : index
    %64 = vector.load %arg6[%c0_69, %c0_70] : memref<8x128xf32, #tpu.memory_space<vmem>>, vector<8x128xf32>
    %65 = arith.addf %64, %63 : vector<8x128xf32>
    %c0_71 = arith.constant 0 : index
    %c0_72 = arith.constant 0 : index
    %66 = vector.load %arg6[%c0_71, %c0_72] : memref<8x128xf32, #tpu.memory_space<vmem>>, vector<8x128xf32>
    tpu.vector_store %arg6[%c0_71, %c0_72], %65 {strides = array<i32>} : memref<8x128xf32, #tpu.memory_space<vmem>>, vector<8x128xf32>,
    %c0_i32_73 = arith.constant 0 : i32
    %67 = arith.cmpi eq, %arg1, %c0_i32_73 : i32
    %68 = arith.extui %67 : i1 to i32
    %c0_i32_74 = arith.constant 0 : i32
    %69 = arith.cmpi ne, %68, %c0_i32_74 : i32
    scf.if %69 {
      %c0_75 = arith.constant 0 : index
      %c0_76 = arith.constant 0 : index
      %70 = vector.load %arg6[%c0_75, %c0_76] : memref<8x128xf32, #tpu.memory_space<vmem>>, vector<8x128xf32>
      %cst = arith.constant dense<0.000000e+00> : vector<8xf32>
      %71 = vector.multi_reduction <add>, %70, %cst [1] : vector<8x128xf32> to vector<8xf32>
      %72 = vector.shape_cast %71 : vector<8xf32> to vector<8x1xf32>
      %cst_77 = arith.constant 5.000000e-01 : f32
      %73 = vector.broadcast %cst_77 : f32 to vector<8x1xf32>
      %74 = arith.mulf %73, %72 : vector<8x1xf32>
      %c0_78 = arith.constant 0 : index
      %c0_79 = arith.constant 0 : index
      %75 = vector.load %arg4[%c0_78, %c0_79] : memref<8x1xf32, #tpu.memory_space<vmem>>, vector<8x1xf32>
      tpu.vector_store %arg4[%c0_78, %c0_79], %74 {strides = array<i32>} : memref<8x1xf32, #tpu.memory_space<vmem>>, vector<8x1xf32>,
    } else {
    }
    return
  }
  func.func @transform_0(%arg0: i32, %arg1: i32) -> (i32, i32) {
    %c0_i32 = arith.constant 0 : i32
    return %arg0, %arg1 : i32, i32
  }
  func.func @transform_1(%arg0: i32, %arg1: i32) -> (i32, i32) {
    %c0_i32 = arith.constant 0 : i32
    return %arg0, %arg1 : i32, i32
  }
  func.func @transform_2(%arg0: i32, %arg1: i32) -> (i32, i32) {
    %c0_i32 = arith.constant 0 : i32
    %c0_i32_0 = arith.constant 0 : i32
    return %arg0, %c0_i32 : i32, i32
  }
  func.func @transform_3(%arg0: i32, %arg1: i32) -> (i32, i32) {
    %c0_i32 = arith.constant 0 : i32
    return %arg0, %arg1 : i32, i32
  }
}

</mosaic_0001>

<llo_original>
// kernel: fn.1
$region0: #{fn.1}
  #allocation0 [shape = 'u32[]', space=smem, size = 0x4, offset = 0x4, fixed_abs, tag = 'smem constant byte address 0x4 - core index']
  #allocation1 [shape = 'u32[144,128]{1,0:T(1,128)}', space=vmem, size = 0x12000, scoped, tag = 'internal scratch']
  #allocation2 [shape = 'f32[8,128]{1,0:T(8,128)}', space=vmem, size = 0x1000, scoped, tag = 'scratch operand']
  %s0 = inlined_call_operand.vmem [shape: f32[8,1024], index: 0, kind: input, shape index: {}]
  %s1 = inlined_call_operand.vmem [shape: f32[8,1024], index: 1, kind: input, shape index: {}]
  %s2 = inlined_call_operand.vmem [shape: f32[8,1], index: 2, kind: output, shape index: {0}]
  %s3 = inlined_call_operand.vmem [shape: f32[8,1024], index: 3, kind: output, shape index: {1}]
  %4 = xla_tuple %s2, %s3
  %s5 = sld [smem:[#allocation0]]
  $region34: #{fn.1} parent=0
    _
  %s7 = ssub.s32 1, %s5
  %s8 = scalar_select 0, %s7, %s5
  // Predicated region
  $region2: #{fn.1} parent=0 // pred_check
    _
  $region3: #{fn.1} parent=0 // pred_check_branch
    %10 = sbr.rel (0) target = $region5
  $region4: #{fn.1} parent=0 // pred_region
    _
  $region5: #{fn.1} parent=0 // pred_fallthru
    _
  // Predicated region
  $region6: #{fn.1} parent=0 // pred_check
    _
  $region7: #{fn.1} parent=0 // pred_check_branch
    %12 = sbr.rel (0) target = $region9
  $region8: #{fn.1} parent=0 // pred_region
    _
  $region9: #{fn.1} parent=0 // pred_fallthru
    _
  %p13 = scmp.eq.s32.totalorder 0, 0
  // Predicated region
  $region10: #{fn.1} parent=0 // pred_check
    %p14 = pneg %p13
  $region11: #{fn.1} parent=0 // pred_check_branch
    %16 = sbr.rel (%p14) target = $region13
  $region12: #{fn.1} parent=0 // pred_region
    %17 = vst [vmem:[#allocation2] sm:$0xff] 0.0
  $region13: #{fn.1} parent=0 // pred_fallthru
    _
  %v18 = vld [vmem:[%s0] sm:$0xff]
  %v19 = vld [vmem:[%s1] sm:$0xff]
  %v20 = vsub.f32 %v19, %v18
  %21 = vst [vmem:[%s3] sm:$0xff] %v20
  %v22 = vmul.f32 %v20, %v20
  %v23 = vld [vmem:[#allocation2] sm:$0xff]
  %v24 = vadd.f32 %v23, %v22
  %25 = vst [vmem:[#allocation2] sm:$0xff] %v24
  %v26 = vld [vmem:[%s0 + $0x8] sm:$0xff]
  %v27 = vld [vmem:[%s1 + $0x8] sm:$0xff]
  %v28 = vsub.f32 %v27, %v26
  %29 = vst [vmem:[%s3 + $0x8] sm:$0xff] %v28
  %v30 = vmul.f32 %v28, %v28
  %v31 = vld [vmem:[#allocation2] sm:$0xff]
  %v32 = vadd.f32 %v31, %v30
  %33 = vst [vmem:[#allocation2] sm:$0xff] %v32
  %v34 = vld [vmem:[%s0 + $0x10] sm:$0xff]
  %v35 = vld [vmem:[%s1 + $0x10] sm:$0xff]
  %v36 = vsub.f32 %v35, %v34
  %37 = vst [vmem:[%s3 + $0x10] sm:$0xff] %v36
  %v38 = vmul.f32 %v36, %v36
  %v39 = vld [vmem:[#allocation2] sm:$0xff]
  %v40 = vadd.f32 %v39, %v38
  %41 = vst [vmem:[#allocation2] sm:$0xff] %v40
  %v42 = vld [vmem:[%s0 + $0x18] sm:$0xff]
  %v43 = vld [vmem:[%s1 + $0x18] sm:$0xff]
  %v44 = vsub.f32 %v43, %v42
  %45 = vst [vmem:[%s3 + $0x18] sm:$0xff] %v44
  %v46 = vmul.f32 %v44, %v44
  %v47 = vld [vmem:[#allocation2] sm:$0xff]
  %v48 = vadd.f32 %v47, %v46
  %49 = vst [vmem:[#allocation2] sm:$0xff] %v48
  %v50 = vld [vmem:[%s0 + $0x20] sm:$0xff]
  %v51 = vld [vmem:[%s1 + $0x20] sm:$0xff]
  %v52 = vsub.f32 %v51, %v50
  %53 = vst [vmem:[%s3 + $0x20] sm:$0xff] %v52
  %v54 = vmul.f32 %v52, %v52
  %v55 = vld [vmem:[#allocation2] sm:$0xff]
  %v56 = vadd.f32 %v55, %v54
  %57 = vst [vmem:[#allocation2] sm:$0xff] %v56
  %v58 = vld [vmem:[%s0 + $0x28] sm:$0xff]
  %v59 = vld [vmem:[%s1 + $0x28] sm:$0xff]
  %v60 = vsub.f32 %v59, %v58
  %61 = vst [vmem:[%s3 + $0x28] sm:$0xff] %v60
  %v62 = vmul.f32 %v60, %v60
  %v63 = vld [vmem:[#allocation2] sm:$0xff]
  %v64 = vadd.f32 %v63, %v62
  %65 = vst [vmem:[#allocation2] sm:$0xff] %v64
  %v66 = vld [vmem:[%s0 + $0x30] sm:$0xff]
  %v67 = vld [vmem:[%s1 + $0x30] sm:$0xff]
  %v68 = vsub.f32 %v67, %v66
  %69 = vst [vmem:[%s3 + $0x30] sm:$0xff] %v68
  %v70 = vmul.f32 %v68, %v68
  %v71 = vld [vmem:[#allocation2] sm:$0xff]
  %v72 = vadd.f32 %v71, %v70
  %73 = vst [vmem:[#allocation2] sm:$0xff] %v72
  %v74 = vld [vmem:[%s0 + $0x38] sm:$0xff]
  %v75 = vld [vmem:[%s1 + $0x38] sm:$0xff]
  %v76 = vsub.f32 %v75, %v74
  %77 = vst [vmem:[%s3 + $0x38] sm:$0xff] %v76
  %v78 = vmul.f32 %v76, %v76
  %v79 = vld [vmem:[#allocation2] sm:$0xff]
  %v80 = vadd.f32 %v79, %v78
  %81 = vst [vmem:[#allocation2] sm:$0xff] %v80
  // Predicated region
  $region14: #{fn.1} parent=0 // pred_check
    %p82 = pneg %p13
  $region15: #{fn.1} parent=0 // pred_check_branch
    %84 = sbr.rel (%p82) target = $region17
  $region16: #{fn.1} parent=0 // pred_region
    %v85 = vld [vmem:[#allocation2] sm:$0xff]
    %86 = vadd.xlane.f32.xlu0 %v85
    %v87 = vpop.xlane.xlu0 %86
    %v88 = vmul.f32 %v87, 0.5
    %vm89 = vcmask 7168
    %90 = vst.msk [vmem:[%s2] sm:$0xff] %vm89, %v88
  $region17: #{fn.1} parent=0 // pred_fallthru
    _
  // Predicated region
  $region18: #{fn.1} parent=0 // pred_check
    _
  $region19: #{fn.1} parent=0 // pred_check_branch
    %92 = sbr.rel (0) target = $region21
  $region20: #{fn.1} parent=0 // pred_region
    _
  $region21: #{fn.1} parent=0 // pred_fallthru
    _
  // Predicated region
  $region22: #{fn.1} parent=0 // pred_check
    _
  $region23: #{fn.1} parent=0 // pred_check_branch
    %94 = sbr.rel (0) target = $region25
  $region24: #{fn.1} parent=0 // pred_region
    _
  $region25: #{fn.1} parent=0 // pred_fallthru
    _
  // Predicated region
  $region26: #{fn.1} parent=0 // pred_check
    _
  $region27: #{fn.1} parent=0 // pred_check_branch
    %96 = sbr.rel (0) target = $region29
  $region28: #{fn.1} parent=0 // pred_region
    _
  $region29: #{fn.1} parent=0 // pred_fallthru
    _
  // Predicated region
  $region30: #{fn.1} parent=0 // pred_check
    _
  $region31: #{fn.1} parent=0 // pred_check_branch
    %98 = sbr.rel (0) target = $region33
  $region32: #{fn.1} parent=0 // pred_region
    _
  $region33: #{fn.1} parent=0 // pred_fallthru
    _

</llo_original>
